<compile_context>
chip_gen: v7x
topology: tpu7x:2x2x1
jax: 0.10.0
libtpu: 0.0.40
codegen_flags: <defaults>
</compile_context>

<pallas_src>
import jax
import jax.numpy as jnp
from jax.experimental import pallas as pl
from jax.experimental.pallas import tpu as pltpu

LANE = 128     # vreg lane width (last dim)
SUBLANE = 8    # vreg sublane width (second-to-last dim)
TB_CAP = 1024  # max batch rows per grid step (amortizes ~0.35 us per-step cost)

# Single-buffer resident operands (their block index never changes). Guarded so
# the script still runs on jax versions without BlockSpec.pipeline_mode.
_SINGLE_BUFFER = {"pipeline_mode": pl.Buffered(1)} if hasattr(pl, "Buffered") else {}


def _round_up(x, m):
    return (x + m - 1) // m * m


# ---------------------------------------------------------------------------
# Kernel
# ---------------------------------------------------------------------------
def policy_net_kernel(x_ref, w1_ref, b1_ref, w2_ref, b2_ref, w3_ref, b3_ref,
                      out_ref):
    # x_ref: (TB, Din) f32 ; weights bf16 laid out (in, out) ; biases f32 (1, out)
    x = x_ref[...].astype(jnp.bfloat16)      # in-kernel cast (VPU), no extra HBM pass

    # fc1 + relu  (bf16 MXU operands, f32 accumulate, f32 VPU elementwise)
    h1 = jnp.dot(x, w1_ref[...], preferred_element_type=jnp.float32)
    h1 = jnp.maximum(h1 + b1_ref[...], 0.0)

    # fc2 + relu
    h2 = jnp.dot(h1.astype(jnp.bfloat16), w2_ref[...],
                 preferred_element_type=jnp.float32)
    h2 = jnp.maximum(h2 + b2_ref[...], 0.0)

    # fc3
    logits = jnp.dot(h2.astype(jnp.bfloat16), w3_ref[...],
                     preferred_element_type=jnp.float32)
    logits = logits + b3_ref[...]

    # numerically stable softmax over the true output width (no padded columns)
    m = jnp.max(logits, axis=-1, keepdims=True)
    e = jnp.exp(logits - m)
    denom = jnp.sum(e, axis=-1, keepdims=True)
    # approx reciprocal (EUP slot): rows sum to 1 to ~1e-3; renormalize
    # downstream if exact sums are required.
    out_ref[...] = (e * pl.reciprocal(denom, approx=True)).astype(out_ref.dtype)


# ---------------------------------------------------------------------------
# One-time parameter preparation (transpose / pad hidden / cast) — not per call.
# ---------------------------------------------------------------------------
def prepare_params(params):
    """Torch-convention params -> (in,out)-layout bf16 weights, hidden padded to 128."""
    hidden_dim, input_dim = params["w1"].shape
    output_dim = params["w3"].shape[0]
    h_p = _round_up(hidden_dim, LANE)        # zero-padded hidden cols/rows are inert

    def pad_t(w, rows, cols):
        wt = w.T
        return jnp.pad(wt, ((0, rows - wt.shape[0]), (0, cols - wt.shape[1])))

    def pad_bias(b, cols):
        return jnp.pad(b[None, :], ((0, 0), (0, cols - b.shape[0]))).astype(jnp.float32)

    return {
        "w1": pad_t(params["w1"], input_dim, h_p).astype(jnp.bfloat16),   # (Din, H_p)
        "b1": pad_bias(params["b1"], h_p),                                # (1, H_p)
        "w2": pad_t(params["w2"], h_p, h_p).astype(jnp.bfloat16),         # (H_p, H_p)
        "b2": pad_bias(params["b2"], h_p),                                # (1, H_p)
        "w3": pad_t(params["w3"], h_p, output_dim).astype(jnp.bfloat16),  # (H_p, Dout)
        "b3": pad_bias(params["b3"], output_dim),                         # (1, Dout)
    }


# ---------------------------------------------------------------------------
# Sizing helpers
# ---------------------------------------------------------------------------
def _vmem_footprint_bytes(tb, input_dim, h_p, output_dim):
    io = 2 * tb * input_dim * 4 + 2 * tb * output_dim * 2        # x f32 / out bf16, dbl-buffered
    weights = 2 * (input_dim * h_p + h_p * h_p + h_p * output_dim)  # bf16, single-buffered
    biases = 4 * (2 * h_p + output_dim)                          # f32
    interm = 3 * tb * h_p * 4                                    # f32 live intermediates
    return io + weights + biases + interm


def _vmem_budget_bytes():
    """~75% of physical VMEM: ~96 MiB on v5e/v6e (128 MiB), ~48 MiB on v7x (64 MiB/TC)."""
    try:
        phys = int(pltpu.get_tpu_info().vmem_capacity_bytes)
    except Exception:
        phys = 64 * 1024 * 1024  # conservative fallback (v7x per-TC)
    return (phys * 3) // 4


def _pick_batch_tile(batch):
    tb_full = _round_up(max(batch, 1), SUBLANE)
    if tb_full <= SUBLANE:
        return SUBLANE
    if tb_full <= 2 * TB_CAP:
        # Prefer >=2 tiles so v7x's two TensorCores both get work ("parallel" axis).
        return min(TB_CAP, _round_up(pl.cdiv(tb_full, 2), SUBLANE))
    return TB_CAP


# ---------------------------------------------------------------------------
# Forward wrapper
# ---------------------------------------------------------------------------
@jax.jit
def policy_network_forward(x, prepped):
    """x: (batch, input_dim) f32 -> (batch, output_dim) bf16 softmax probabilities."""
    w1, b1 = prepped["w1"], prepped["b1"]
    w2, b2 = prepped["w2"], prepped["b2"]
    w3, b3 = prepped["w3"], prepped["b3"]

    batch, input_dim = x.shape
    h_p = w1.shape[1]
    output_dim = w3.shape[1]

    budget = _vmem_budget_bytes()
    tb = _pick_batch_tile(batch)
    # Shrink the tile rather than clamping vmem_limit below the real footprint.
    while tb > SUBLANE and _vmem_footprint_bytes(tb, input_dim, h_p, output_dim) > budget:
        tb = max(SUBLANE, _round_up(tb // 2, SUBLANE))

    batch_p = _round_up(batch, tb)
    num_tiles = batch_p // tb

    # Batch-only zero padding (inert rows, sliced off below). No feature padding
    # and no wrapper-side bf16 cast -> no extra HBM pass over x.
    if batch_p != batch:
        x = jnp.pad(x, ((0, batch_p - batch), (0, 0)))

    footprint = _vmem_footprint_bytes(tb, input_dim, h_p, output_dim)
    vmem_limit = int(min(max(footprint + (8 << 20), 16 << 20), budget))

    vmem = pltpu.MemorySpace.VMEM

    def resident(shape):
        # Weights/biases never change block index -> keep one VMEM copy only.
        return pl.BlockSpec(shape, lambda i: (0, 0), memory_space=vmem,
                            **_SINGLE_BUFFER)

    out_p = pl.pallas_call(
        policy_net_kernel,
        out_shape=jax.ShapeDtypeStruct((batch_p, output_dim), jnp.bfloat16),
        grid=(num_tiles,),
        in_specs=[
            pl.BlockSpec((tb, input_dim), lambda i: (i, 0), memory_space=vmem),
            resident(w1.shape), resident(b1.shape),
            resident(w2.shape), resident(b2.shape),
            resident(w3.shape), resident(b3.shape),
        ],
        out_specs=pl.BlockSpec((tb, output_dim), lambda i: (i, 0),
                               memory_space=vmem),
        compiler_params=pltpu.CompilerParams(
            dimension_semantics=("parallel",),
            vmem_limit_bytes=vmem_limit),
    )(x, w1, b1, w2, b2, w3, b3)

    return out_p[:batch] if batch_p != batch else out_p


# ---------------------------------------------------------------------------
# Reference & test
# ---------------------------------------------------------------------------
def init_params(key, input_dim, hidden_dim, output_dim):
    """Deterministic synthetic parameters with torch nn.Linear shapes."""
    ks = jax.random.split(key, 6)

    def unif(k, shape, fan_in):
        bound = 1.0 / jnp.sqrt(fan_in)
        return jax.random.uniform(k, shape, jnp.float32, -bound, bound)

    return {
        "w1": unif(ks[0], (hidden_dim, input_dim), input_dim),
        "b1": unif(ks[1], (hidden_dim,), input_dim),
        "w2": unif(ks[2], (hidden_dim, hidden_dim), hidden_dim),
        "b2": unif(ks[3], (hidden_dim,), hidden_dim),
        "w3": unif(ks[4], (output_dim, hidden_dim), hidden_dim),
        "b3": unif(ks[5], (output_dim,), hidden_dim),
    }


def reference_forward(x, params):
    h1 = jnp.maximum(x @ params["w1"].T + params["b1"], 0.0)
    h2 = jnp.maximum(h1 @ params["w2"].T + params["b2"], 0.0)
    logits = h2 @ params["w3"].T + params["b3"]
    return jax.nn.softmax(logits, axis=-1)


if __name__ == "__main__":
    key = jax.random.PRNGKey(0)
    k_x, k_p = jax.random.split(key)

    batch, input_dim, hidden_dim, output_dim = 8, 16, 32, 8
    x = jax.random.normal(k_x, (batch, input_dim), jnp.float32)
    params = init_params(k_p, input_dim, hidden_dim, output_dim)

    prepped = prepare_params(params)            # one-time prep (load time)

    out = policy_network_forward(x, prepped)
    out = jax.block_until_ready(out)

    ref = reference_forward(x, params)
    assert out.shape == (batch, output_dim)
    out_f32 = out.astype(jnp.float32)
    # bf16 MXU operands + bf16 output + approx reciprocal -> looser tolerance vs f32 ref.
    assert jnp.allclose(out_f32, ref, atol=2e-2, rtol=2e-2), "mismatch vs reference"
    assert jnp.allclose(jnp.sum(out_f32, axis=-1), 1.0, atol=1e-2), \
        "softmax rows must sum to ~1"

    print("KERNEL_OK")
</pallas_src>

<mosaic_0001>
module attributes {stable_mosaic.version = 11 : i64} {
  func.func @policy_net_kernel(%arg0: i32, %arg1: memref<8x16xf32, #tpu.memory_space<vmem>>, %arg2: memref<16x128xbf16, #tpu.memory_space<vmem>>, %arg3: memref<1x128xf32, #tpu.memory_space<vmem>>, %arg4: memref<128x128xbf16, #tpu.memory_space<vmem>>, %arg5: memref<1x128xf32, #tpu.memory_space<vmem>>, %arg6: memref<128x8xbf16, #tpu.memory_space<vmem>>, %arg7: memref<1x8xf32, #tpu.memory_space<vmem>>, %arg8: memref<8x8xbf16, #tpu.memory_space<vmem>>) attributes {dimension_semantics = [#tpu.dimension_semantics<parallel>], iteration_bounds = array<i64: 1>, scalar_prefetch = 0 : i64, scratch_operands = 0 : i64, tpu.core_type = #tpu.core_type<tc>, window_params = [{transform_indices = @transform_0, window_bounds = array<i64: 8, 16>}, {pipeline_mode = #tpu.pipeline_mode<synchronous>, transform_indices = @transform_1, window_bounds = array<i64: 16, 128>}, {pipeline_mode = #tpu.pipeline_mode<synchronous>, transform_indices = @transform_2, window_bounds = array<i64: 1, 128>}, {pipeline_mode = #tpu.pipeline_mode<synchronous>, transform_indices = @transform_3, window_bounds = array<i64: 128, 128>}, {pipeline_mode = #tpu.pipeline_mode<synchronous>, transform_indices = @transform_4, window_bounds = array<i64: 1, 128>}, {pipeline_mode = #tpu.pipeline_mode<synchronous>, transform_indices = @transform_5, window_bounds = array<i64: 128, 8>}, {pipeline_mode = #tpu.pipeline_mode<synchronous>, transform_indices = @transform_6, window_bounds = array<i64: 1, 8>}, {transform_indices = @transform_7, window_bounds = array<i64: 8, 8>}]} {
    %c0 = arith.constant 0 : index
    %c0_0 = arith.constant 0 : index
    %0 = vector.load %arg1[%c0, %c0_0] : memref<8x16xf32, #tpu.memory_space<vmem>>, vector<8x16xf32>
    %1 = arith.truncf %0 : vector<8x16xf32> to vector<8x16xbf16>
    %c0_1 = arith.constant 0 : index
    %c0_2 = arith.constant 0 : index
    %2 = vector.load %arg2[%c0_1, %c0_2] : memref<16x128xbf16, #tpu.memory_space<vmem>>, vector<16x128xbf16>
    %cst = arith.constant dense<0.000000e+00> : vector<8x128xf32>
    %3 = tpu.matmul %1, %2, %cst {dimension_numbers = #tpu.dot_dimension_numbers<[1], [0], [0], [1], [0, 0, 1, 1], [], []>} : vector<8x16xbf16>, vector<16x128xbf16>, vector<8x128xf32> -> vector<8x128xf32>
    %c0_3 = arith.constant 0 : index
    %c0_4 = arith.constant 0 : index
    %4 = vector.load %arg3[%c0_3, %c0_4] : memref<1x128xf32, #tpu.memory_space<vmem>>, vector<1x128xf32>
    %5 = vector.broadcast %4 : vector<1x128xf32> to vector<8x128xf32>
    %6 = arith.addf %3, %5 : vector<8x128xf32>
    %cst_5 = arith.constant 0.000000e+00 : f32
    %7 = vector.broadcast %cst_5 : f32 to vector<8x128xf32>
    %8 = arith.maximumf %6, %7 : vector<8x128xf32>
    %9 = arith.truncf %8 : vector<8x128xf32> to vector<8x128xbf16>
    %c0_6 = arith.constant 0 : index
    %c0_7 = arith.constant 0 : index
    %10 = vector.load %arg4[%c0_6, %c0_7] : memref<128x128xbf16, #tpu.memory_space<vmem>>, vector<128x128xbf16>
    %cst_8 = arith.constant dense<0.000000e+00> : vector<8x128xf32>
    %11 = tpu.matmul %9, %10, %cst_8 {dimension_numbers = #tpu.dot_dimension_numbers<[1], [0], [0], [1], [0, 0, 1, 1], [], []>} : vector<8x128xbf16>, vector<128x128xbf16>, vector<8x128xf32> -> vector<8x128xf32>
    %c0_9 = arith.constant 0 : index
    %c0_10 = arith.constant 0 : index
    %12 = vector.load %arg5[%c0_9, %c0_10] : memref<1x128xf32, #tpu.memory_space<vmem>>, vector<1x128xf32>
    %13 = vector.broadcast %12 : vector<1x128xf32> to vector<8x128xf32>
    %14 = arith.addf %11, %13 : vector<8x128xf32>
    %cst_11 = arith.constant 0.000000e+00 : f32
    %15 = vector.broadcast %cst_11 : f32 to vector<8x128xf32>
    %16 = arith.maximumf %14, %15 : vector<8x128xf32>
    %17 = arith.truncf %16 : vector<8x128xf32> to vector<8x128xbf16>
    %c0_12 = arith.constant 0 : index
    %c0_13 = arith.constant 0 : index
    %18 = vector.load %arg6[%c0_12, %c0_13] : memref<128x8xbf16, #tpu.memory_space<vmem>>, vector<128x8xbf16>
    %cst_14 = arith.constant dense<0.000000e+00> : vector<8x8xf32>
    %19 = tpu.matmul %17, %18, %cst_14 {dimension_numbers = #tpu.dot_dimension_numbers<[1], [0], [0], [1], [0, 0, 1, 1], [], []>} : vector<8x128xbf16>, vector<128x8xbf16>, vector<8x8xf32> -> vector<8x8xf32>
    %c0_15 = arith.constant 0 : index
    %c0_16 = arith.constant 0 : index
    %20 = vector.load %arg7[%c0_15, %c0_16] : memref<1x8xf32, #tpu.memory_space<vmem>>, vector<1x8xf32>
    %21 = vector.broadcast %20 : vector<1x8xf32> to vector<8x8xf32>
    %22 = arith.addf %19, %21 : vector<8x8xf32>
    %cst_17 = arith.constant dense<0xFF800000> : vector<8xf32>
    %23 = vector.multi_reduction <maximumf>, %22, %cst_17 [1] : vector<8x8xf32> to vector<8xf32>
    %24 = vector.shape_cast %23 : vector<8xf32> to vector<8x1xf32>
    %25 = vector.broadcast %24 : vector<8x1xf32> to vector<8x8xf32>
    %26 = arith.subf %22, %25 : vector<8x8xf32>
    %27 = math.exp %26 : vector<8x8xf32>
    %cst_18 = arith.constant dense<0.000000e+00> : vector<8xf32>
    %28 = vector.multi_reduction <add>, %27, %cst_18 [1] : vector<8x8xf32> to vector<8xf32>
    %29 = vector.shape_cast %28 : vector<8xf32> to vector<8x1xf32>
    %30 = tpu.reciprocal %29 {approx = true} : vector<8x1xf32> -> vector<8x1xf32>
    %31 = vector.broadcast %30 : vector<8x1xf32> to vector<8x8xf32>
    %32 = arith.mulf %27, %31 : vector<8x8xf32>
    %33 = arith.truncf %32 : vector<8x8xf32> to vector<8x8xbf16>
    %c0_19 = arith.constant 0 : index
    %c0_20 = arith.constant 0 : index
    %34 = vector.load %arg8[%c0_19, %c0_20] : memref<8x8xbf16, #tpu.memory_space<vmem>>, vector<8x8xbf16>
    tpu.vector_store %arg8[%c0_19, %c0_20], %33 {strides = array<i32>} : memref<8x8xbf16, #tpu.memory_space<vmem>>, vector<8x8xbf16>,
    return
  }
  func.func @transform_0(%arg0: i32) -> (i32, i32) {
    %c0_i32 = arith.constant 0 : i32
    %c0_i32_0 = arith.constant 0 : i32
    return %arg0, %c0_i32 : i32, i32
  }
  func.func @transform_1(%arg0: i32) -> (i32, i32) {
    %c0_i32 = arith.constant 0 : i32
    %c0_i32_0 = arith.constant 0 : i32
    %c0_i32_1 = arith.constant 0 : i32
    return %c0_i32, %c0_i32_0 : i32, i32
  }
  func.func @transform_2(%arg0: i32) -> (i32, i32) {
    %c0_i32 = arith.constant 0 : i32
    %c0_i32_0 = arith.constant 0 : i32
    %c0_i32_1 = arith.constant 0 : i32
    return %c0_i32, %c0_i32_0 : i32, i32
  }
  func.func @transform_3(%arg0: i32) -> (i32, i32) {
    %c0_i32 = arith.constant 0 : i32
    %c0_i32_0 = arith.constant 0 : i32
    %c0_i32_1 = arith.constant 0 : i32
    return %c0_i32, %c0_i32_0 : i32, i32
  }
  func.func @transform_4(%arg0: i32) -> (i32, i32) {
    %c0_i32 = arith.constant 0 : i32
    %c0_i32_0 = arith.constant 0 : i32
    %c0_i32_1 = arith.constant 0 : i32
    return %c0_i32, %c0_i32_0 : i32, i32
  }
  func.func @transform_5(%arg0: i32) -> (i32, i32) {
    %c0_i32 = arith.constant 0 : i32
    %c0_i32_0 = arith.constant 0 : i32
    %c0_i32_1 = arith.constant 0 : i32
    return %c0_i32, %c0_i32_0 : i32, i32
  }
  func.func @transform_6(%arg0: i32) -> (i32, i32) {
    %c0_i32 = arith.constant 0 : i32
    %c0_i32_0 = arith.constant 0 : i32
    %c0_i32_1 = arith.constant 0 : i32
    return %c0_i32, %c0_i32_0 : i32, i32
  }
  func.func @transform_7(%arg0: i32) -> (i32, i32) {
    %c0_i32 = arith.constant 0 : i32
    %c0_i32_0 = arith.constant 0 : i32
    return %arg0, %c0_i32 : i32, i32
  }
}

</mosaic_0001>

<llo_original>
// kernel: policy_network_forward.1
$region0: #{policy_network_forward.1}
  #allocation0 [shape = 'u32[]', space=smem, size = 0x4, offset = 0x4, fixed_abs, tag = 'smem constant byte address 0x4 - core index']
  #allocation1 [shape = 'u32[144,128]{1,0:T(1,128)}', space=vmem, size = 0x12000, scoped, tag = 'internal scratch']
  %s0 = inlined_call_operand.vmem [shape: f32[8,16], index: 0, kind: input, shape index: {}]
  %s1 = inlined_call_operand.vmem [shape: bf16[16,128], index: 1, kind: input, shape index: {}]
  %s2 = inlined_call_operand.vmem [shape: f32[1,128], index: 2, kind: input, shape index: {}]
  %s3 = inlined_call_operand.vmem [shape: bf16[128,128], index: 3, kind: input, shape index: {}]
  %s4 = inlined_call_operand.vmem [shape: f32[1,128], index: 4, kind: input, shape index: {}]
  %s5 = inlined_call_operand.vmem [shape: bf16[128,8], index: 5, kind: input, shape index: {}]
  %s6 = inlined_call_operand.vmem [shape: f32[1,8], index: 6, kind: input, shape index: {}]
  %s7 = inlined_call_operand.hbm [shape: bf16[8,8], index: 7, kind: output, shape index: {}]
  %s8 = sld [smem:[#allocation0]]
  $region38: #{policy_network_forward.1} parent=0
    _
  %s10 = ssub.s32 1, %s8
  %s11 = scalar_select 0, %s10, %s8
  $region1: #{policy_network_forward.1} parent=0
    #allocation2 [shape = 'u8[2048]{0}', space=vmem, size = 0x800, scoped, tag = 'output window, operand 0, single buffered']
    #allocation3 [shape = 's32[1]{0}', space=sflag, size = 0x4, scoped, tag = 'scoped memory for policy_network_forward.1']
    %12 = vsyncpa [#allocation3], 0
    // Predicated region
    $region2: #{policy_network_forward.1} parent=1 // pred_check
      _
    $region3: #{policy_network_forward.1} parent=1 // pred_check_branch
      %14 = sbr.rel (0) target = $region5
    $region4: #{policy_network_forward.1} parent=1 // pred_region
      _
    $region5: #{policy_network_forward.1} parent=1 // pred_fallthru
      _
    // Predicated region
    $region6: #{policy_network_forward.1} parent=1 // pred_check
      _
    $region7: #{policy_network_forward.1} parent=1 // pred_check_branch
      %16 = sbr.rel (0) target = $region9
    $region8: #{policy_network_forward.1} parent=1 // pred_region
      _
    $region9: #{policy_network_forward.1} parent=1 // pred_fallthru
      _
    // Predicated region
    $region10: #{policy_network_forward.1} parent=1 // pred_check
      _
    $region11: #{policy_network_forward.1} parent=1 // pred_check_branch
      %18 = sbr.rel (0) target = $region13
    $region12: #{policy_network_forward.1} parent=1 // pred_region
      _
    $region13: #{policy_network_forward.1} parent=1 // pred_fallthru
      _
    // Predicated region
    $region14: #{policy_network_forward.1} parent=1 // pred_check
      _
    $region15: #{policy_network_forward.1} parent=1 // pred_check_branch
      %20 = sbr.rel (0) target = $region17
    $region16: #{policy_network_forward.1} parent=1 // pred_region
      _
    $region17: #{policy_network_forward.1} parent=1 // pred_fallthru
      _
    // Predicated region
    $region18: #{policy_network_forward.1} parent=1 // pred_check
      _
    $region19: #{policy_network_forward.1} parent=1 // pred_check_branch
      %22 = sbr.rel (0) target = $region21
    $region20: #{policy_network_forward.1} parent=1 // pred_region
      _
    $region21: #{policy_network_forward.1} parent=1 // pred_fallthru
      _
    // Predicated region
    $region22: #{policy_network_forward.1} parent=1 // pred_check
      _
    $region23: #{policy_network_forward.1} parent=1 // pred_check_branch
      %24 = sbr.rel (0) target = $region25
    $region24: #{policy_network_forward.1} parent=1 // pred_region
      _
    $region25: #{policy_network_forward.1} parent=1 // pred_fallthru
      _
    // Predicated region
    $region26: #{policy_network_forward.1} parent=1 // pred_check
      _
    $region27: #{policy_network_forward.1} parent=1 // pred_check_branch
      %26 = sbr.rel (0) target = $region29
    $region28: #{policy_network_forward.1} parent=1 // pred_region
      _
    $region29: #{policy_network_forward.1} parent=1 // pred_fallthru
      _
    %v28 = vld [vmem:[%s0] sm:$0xff]
    %v29 = vpack.c.bf16 %v28, %v28
    %v30 = vld [vmem:[%s1] sm:$0xf]
    %v31 = vld [vmem:[%s1 + $0x4] sm:$0xf]
    %v32 = vld [vmem:[%s2] sm:$0x1]
    %v34 = vlaneseq
    %v35 = vshrl.u32 %v34, 7
    %v36 = vsub.s32 0, %v35
    %v37 = vrot.slane %v32, %v36
    %v41 = vunpack.c.l.b16 %v30
    %v42 = vunpack.c.l.b16 %v31
    %v43 = vpack.c.b16 %v42, %v41
    %vm45 = vcmask 130048
    %v47 = vsel %vm45, %v29, 0
    %49 = vmatprep.subr.bf16.mxu0 0
    %50 = vmatpush1.bf16.msra.mxu0 %v43
    %51 = vmatprep.subr.bf16.mxu0 0
    %52 = vmatpush1.bf16.msra.mxu0 0
    %53 = vmatprep.subr.bf16.mxu0 0
    %54 = vmatpush1.bf16.msra.mxu0 0
    %55 = vmatprep.subr.bf16.mxu0 0
    %56 = vmatpush1.bf16.msra.mxu0 0
    %57 = vmatprep.subr.bf16.mxu0 0
    %58 = vmatpush1.bf16.msra.mxu0 0
    %59 = vmatprep.subr.bf16.mxu0 0
    %60 = vmatpush1.bf16.msra.mxu0 0
    %61 = vmatprep.subr.bf16.mxu0 0
    %62 = vmatpush1.bf16.msra.mxu0 0
    %63 = vmatprep.subr.bf16.mxu0 0
    %64 = vmatpush1.bf16.msra.mxu0 0
    %65 = vmatprep.subr.bf16.mxu0 0
    %66 = vmatpush1.bf16.msra.mxu0 0
    %67 = vmatprep.subr.bf16.mxu0 0
    %68 = vmatpush1.bf16.msra.mxu0 0
    %69 = vmatprep.subr.bf16.mxu0 0
    %70 = vmatpush1.bf16.msra.mxu0 0
    %71 = vmatprep.subr.bf16.mxu0 0
    %72 = vmatpush1.bf16.msra.mxu0 0
    %73 = vmatprep.subr.bf16.mxu0 0
    %74 = vmatpush1.bf16.msra.mxu0 0
    %75 = vmatprep.subr.bf16.mxu0 0
    %76 = vmatpush1.bf16.msra.mxu0 0
    %77 = vmatprep.subr.bf16.mxu0 0
    %78 = vmatpush1.bf16.msra.mxu0 0
    %79 = vmatprep.subr.bf16.mxu0 0
    %80 = vmatpush1.bf16.msra.mxu0 0
    %81 = vmatprep.mubr.bf16.mxu0 0
    %82 = vmatmul.mubr.bf16.gmra.mrb[0].mxu0 %v47
    %v83 = vpop.f32.mrb[0].mxu0
    %v84 = vadd.f32 %v37, %v83
    %v85 = vpop.f32.mrb[0].mxu0
    %v86 = vpop.f32.mrb[0].mxu0
    %v87 = vpop.f32.mrb[0].mxu0
    %88 = vdwg.mxu0
    %v89 = vmax.f32 %v84, 0.0
    %v90 = vpack.c.bf16 %v89, %v89
    %v91 = vld [vmem:[%s3] sm:$0xf]
    %v92 = vld [vmem:[%s3 + $0x4] sm:$0xf]
    %v93 = vld [vmem:[%s3 + $0x8] sm:$0xf]
    %v94 = vld [vmem:[%s3 + $0xc] sm:$0xf]
    %v95 = vld [vmem:[%s3 + $0x10] sm:$0xf]
    %v96 = vld [vmem:[%s3 + $0x14] sm:$0xf]
    %v97 = vld [vmem:[%s3 + $0x18] sm:$0xf]
    %v98 = vld [vmem:[%s3 + $0x1c] sm:$0xf]
    %v99 = vld [vmem:[%s3 + $0x20] sm:$0xf]
    %v100 = vld [vmem:[%s3 + $0x24] sm:$0xf]
    %v101 = vld [vmem:[%s3 + $0x28] sm:$0xf]
    %v102 = vld [vmem:[%s3 + $0x2c] sm:$0xf]
    %v103 = vld [vmem:[%s3 + $0x30] sm:$0xf]
    %v104 = vld [vmem:[%s3 + $0x34] sm:$0xf]
    %v105 = vld [vmem:[%s3 + $0x38] sm:$0xf]
    %v106 = vld [vmem:[%s3 + $0x3c] sm:$0xf]
    %v107 = vld [vmem:[%s4] sm:$0x1]
    %v109 = vlaneseq
    %v110 = vshrl.u32 %v109, 7
    %v111 = vsub.s32 0, %v110
    %v112 = vrot.slane %v107, %v111
    %v130 = vunpack.c.l.b16 %v91
    %v131 = vunpack.c.l.b16 %v92
    %v132 = vunpack.c.l.b16 %v93
    %v133 = vunpack.c.l.b16 %v94
    %v134 = vunpack.c.l.b16 %v95
    %v135 = vunpack.c.l.b16 %v96
    %v136 = vunpack.c.l.b16 %v97
    %v137 = vunpack.c.l.b16 %v98
    %v138 = vunpack.c.l.b16 %v99
    %v139 = vunpack.c.l.b16 %v100
    %v140 = vunpack.c.l.b16 %v101
    %v141 = vunpack.c.l.b16 %v102
    %v142 = vunpack.c.l.b16 %v103
    %v143 = vunpack.c.l.b16 %v104
    %v144 = vunpack.c.l.b16 %v105
    %v145 = vunpack.c.l.b16 %v106
    %v146 = vpack.c.b16 %v131, %v130
    %v147 = vpack.c.b16 %v133, %v132
    %v148 = vpack.c.b16 %v135, %v134
    %v149 = vpack.c.b16 %v137, %v136
    %v150 = vpack.c.b16 %v139, %v138
    %v151 = vpack.c.b16 %v141, %v140
    %v152 = vpack.c.b16 %v143, %v142
    %v153 = vpack.c.b16 %v145, %v144
    %162 = vmatprep.subr.bf16.mxu0 0
    %163 = vmatpush1.bf16.msra.mxu0 %v146
    %164 = vmatprep.subr.bf16.mxu0 0
    %165 = vmatpush1.bf16.msra.mxu0 %v147
    %166 = vmatprep.subr.bf16.mxu0 0
    %167 = vmatpush1.bf16.msra.mxu0 %v148
    %168 = vmatprep.subr.bf16.mxu0 0
    %169 = vmatpush1.bf16.msra.mxu0 %v149
    %170 = vmatprep.subr.bf16.mxu0 0
    %171 = vmatpush1.bf16.msra.mxu0 %v150
    %172 = vmatprep.subr.bf16.mxu0 0
    %173 = vmatpush1.bf16.msra.mxu0 %v151
    %174 = vmatprep.subr.bf16.mxu0 0
    %175 = vmatpush1.bf16.msra.mxu0 %v152
    %176 = vmatprep.subr.bf16.mxu0 0
    %177 = vmatpush1.bf16.msra.mxu0 %v153
    %178 = vmatprep.subr.bf16.mxu0 0
    %179 = vmatpush1.bf16.msra.mxu0 0
    %180 = vmatprep.subr.bf16.mxu0 0
    %181 = vmatpush1.bf16.msra.mxu0 0
    %182 = vmatprep.subr.bf16.mxu0 0
    %183 = vmatpush1.bf16.msra.mxu0 0
    %184 = vmatprep.subr.bf16.mxu0 0
    %185 = vmatpush1.bf16.msra.mxu0 0
    %186 = vmatprep.subr.bf16.mxu0 0
    %187 = vmatpush1.bf16.msra.mxu0 0
    %188 = vmatprep.subr.bf16.mxu0 0
    %189 = vmatpush1.bf16.msra.mxu0 0
    %190 = vmatprep.subr.bf16.mxu0 0
    %191 = vmatpush1.bf16.msra.mxu0 0
    %192 = vmatprep.subr.bf16.mxu0 0
    %193 = vmatpush1.bf16.msra.mxu0 0
    %194 = vmatprep.mubr.bf16.mxu0 0
    %195 = vmatmul.mubr.bf16.gmra.mrb[0].mxu0 %v90
    %v196 = vpop.f32.mrb[0].mxu0
    %v197 = vadd.f32 %v112, %v196
    %v198 = vpop.f32.mrb[0].mxu0
    %v199 = vpop.f32.mrb[0].mxu0
    %v200 = vpop.f32.mrb[0].mxu0
    %201 = vdwg.mxu0
    %v202 = vmax.f32 %v197, 0.0
    %v203 = vpack.c.bf16 %v202, %v202
    %v204 = vld [vmem:[%s5] sm:$0xf]
    %v205 = vld [vmem:[%s5 + $0x4] sm:$0xf]
    %v206 = vld [vmem:[%s5 + $0x8] sm:$0xf]
    %v207 = vld [vmem:[%s5 + $0xc] sm:$0xf]
    %v208 = vld [vmem:[%s5 + $0x10] sm:$0xf]
    %v209 = vld [vmem:[%s5 + $0x14] sm:$0xf]
    %v210 = vld [vmem:[%s5 + $0x18] sm:$0xf]
    %v211 = vld [vmem:[%s5 + $0x1c] sm:$0xf]
    %v212 = vld [vmem:[%s5 + $0x20] sm:$0xf]
    %v213 = vld [vmem:[%s5 + $0x24] sm:$0xf]
    %v214 = vld [vmem:[%s5 + $0x28] sm:$0xf]
    %v215 = vld [vmem:[%s5 + $0x2c] sm:$0xf]
    %v216 = vld [vmem:[%s5 + $0x30] sm:$0xf]
    %v217 = vld [vmem:[%s5 + $0x34] sm:$0xf]
    %v218 = vld [vmem:[%s5 + $0x38] sm:$0xf]
    %v219 = vld [vmem:[%s5 + $0x3c] sm:$0xf]
    %v220 = vld [vmem:[%s6] sm:$0x1]
    %v222 = vlaneseq
    %v223 = vshrl.u32 %v222, 7
    %v224 = vsub.s32 0, %v223
    %v225 = vrot.slane %v220, %v224
    %v243 = vunpack.c.l.b16 %v204
    %v244 = vunpack.c.l.b16 %v205
    %v245 = vunpack.c.l.b16 %v206
    %v246 = vunpack.c.l.b16 %v207
    %v247 = vunpack.c.l.b16 %v208
    %v248 = vunpack.c.l.b16 %v209
    %v249 = vunpack.c.l.b16 %v210
    %v250 = vunpack.c.l.b16 %v211
    %v251 = vunpack.c.l.b16 %v212
    %v252 = vunpack.c.l.b16 %v213
    %v253 = vunpack.c.l.b16 %v214
    %v254 = vunpack.c.l.b16 %v215
    %v255 = vunpack.c.l.b16 %v216
    %v256 = vunpack.c.l.b16 %v217
    %v257 = vunpack.c.l.b16 %v218
    %v258 = vunpack.c.l.b16 %v219
    %v259 = vpack.c.b16 %v244, %v243
    %v260 = vpack.c.b16 %v246, %v245
    %v261 = vpack.c.b16 %v248, %v247
    %v262 = vpack.c.b16 %v250, %v249
    %v263 = vpack.c.b16 %v252, %v251
    %v264 = vpack.c.b16 %v254, %v253
    %v265 = vpack.c.b16 %v256, %v255
    %v266 = vpack.c.b16 %v258, %v257
    %275 = vmatprep.subr.bf16.mxu0 0
    %276 = vmatpush1.bf16.msra.mxu0 %v259
    %277 = vmatprep.subr.bf16.mxu0 0
    %278 = vmatpush1.bf16.msra.mxu0 %v260
    %279 = vmatprep.subr.bf16.mxu0 0
    %280 = vmatpush1.bf16.msra.mxu0 %v261
    %281 = vmatprep.subr.bf16.mxu0 0
    %282 = vmatpush1.bf16.msra.mxu0 %v262
    %283 = vmatprep.subr.bf16.mxu0 0
    %284 = vmatpush1.bf16.msra.mxu0 %v263
    %285 = vmatprep.subr.bf16.mxu0 0
    %286 = vmatpush1.bf16.msra.mxu0 %v264
    %287 = vmatprep.subr.bf16.mxu0 0
    %288 = vmatpush1.bf16.msra.mxu0 %v265
    %289 = vmatprep.subr.bf16.mxu0 0
    %290 = vmatpush1.bf16.msra.mxu0 %v266
    %291 = vmatprep.subr.bf16.mxu0 0
    %292 = vmatpush1.bf16.msra.mxu0 0
    %293 = vmatprep.subr.bf16.mxu0 0
    %294 = vmatpush1.bf16.msra.mxu0 0
    %295 = vmatprep.subr.bf16.mxu0 0
    %296 = vmatpush1.bf16.msra.mxu0 0
    %297 = vmatprep.subr.bf16.mxu0 0
    %298 = vmatpush1.bf16.msra.mxu0 0
    %299 = vmatprep.subr.bf16.mxu0 0
    %300 = vmatpush1.bf16.msra.mxu0 0
    %301 = vmatprep.subr.bf16.mxu0 0
    %302 = vmatpush1.bf16.msra.mxu0 0
    %303 = vmatprep.subr.bf16.mxu0 0
    %304 = vmatpush1.bf16.msra.mxu0 0
    %305 = vmatprep.subr.bf16.mxu0 0
    %306 = vmatpush1.bf16.msra.mxu0 0
    %307 = vmatprep.mubr.bf16.mxu0 0
    %308 = vmatmul.mubr.bf16.gmra.mrb[0].mxu0 %v203
    %v309 = vpop.f32.mrb[0].mxu0
    %v310 = vadd.f32 %v225, %v309
    %v311 = vpop.f32.mrb[0].mxu0
    %v312 = vpop.f32.mrb[0].mxu0
    %v313 = vpop.f32.mrb[0].mxu0
    %314 = vdwg.mxu0
    %vm315 = vcmask 64512
    %v316 = vsel %vm315, %v310, -inf
    %317 = vmax.xlane.f32.xlu0 %v316
    %v318 = vpop.xlane.xlu0 %317
    %v319 = vsub.f32 %v310, %v318
    %v320 = vmul.f32 %v319, 1.442695
    %v321 = vpow.pop %v320
    %v322 = vsel %vm315, %v321, 0.0
    %323 = vadd.xlane.f32.xlu0 %v322
    %v324 = vpop.xlane.xlu0 %323
    %v325 = vrcp.pop %v324
    %v326 = vmul.f32 %v321, %v325
    %v327 = vpack.c.bf16 %v326, %v326
    %vm328 = vcmask 60416
    %329 = vst.msk [vmem:[#allocation2] sm:$0xf] %vm328, %v327
    // Predicated region
    $region30: #{policy_network_forward.1} parent=1 // pred_check
      _
    $region31: #{policy_network_forward.1} parent=1 // pred_check_branch
      %331 = sbr.rel (0) target = $region33
    $region32: #{policy_network_forward.1} parent=1 // pred_region
      %s333 = ssub.s32 64, 64
      %334 = vsyncadd [#allocation3], %s333
      %s336 = sshll.u32 [#allocation2], 4
      %s337 = int_to_ptr.vmem [resolvable:$true] %s336
      %339 = dma.vmem_to_hbm [thread:$0]  %s337, 64, %s7, [#allocation3]
    $region33: #{policy_network_forward.1} parent=1 // pred_fallthru
      _
    // Predicated region
    $region34: #{policy_network_forward.1} parent=1 // pred_check
      _
    $region35: #{policy_network_forward.1} parent=1 // pred_check_branch
      %341 = sbr.rel (0) target = $region37
    $region36: #{policy_network_forward.1} parent=1 // pred_region
      %342 = dma.done [#allocation3], 64
    $region37: #{policy_network_forward.1} parent=1 // pred_fallthru
      _
    %343 = vsyncpa [#allocation3], 1

</llo_original>
